<compile_context>
chip_gen: v6e
topology: v6e:2x2x1
jax: 0.10.0
libtpu: 0.0.40
codegen_flags: <defaults>
</compile_context>

<pallas_src>
import jax
import jax.numpy as jnp
from jax.experimental import pallas as pl
from jax.experimental.pallas import tpu as pltpu

_LANE = 128
_FAST_PATH_BYTES = 4 << 20   # < 4 MiB: plain fused XLA elementwise is best
_MIN_GRID_STEPS = 4          # >=4 steps: pipelining + v7x 2-TC megacore split


def _smooth_grad_relu_kernel(x_ref, o_ref):
    # Forward of SmoothGradReLU: input.clamp(min=0)
    o_ref[...] = jnp.maximum(x_ref[...], 0).astype(o_ref.dtype)


def _pick_lanes(total):
    """Largest wide lane width (multiple of 128) that exactly divides total."""
    for lanes in (4096, 2048, 1024, 512, 256, _LANE):
        if total % lanes == 0:
            return lanes
    return None


def _sublane_multiple(dtype):
    # f32 -> 8, bf16/f16 -> 16, int8/fp8 -> 32 (packed sublane granularity).
    return max(8, 32 // jnp.dtype(dtype).itemsize)


def _default_block_bytes():
    """Per-generation block size (HBM-bound: only lever is step amortization)."""
    kind = ""
    try:
        kind = jax.devices()[0].device_kind.lower()
    except Exception:  # pragma: no cover - defensive, e.g. no devices yet
        pass
    if "v5" in kind:
        # ~0.8 TB/s HBM: 4 MiB blocks already put the 0.35us step overhead <4%.
        return 4 << 20
    # v6e / v7x / unknown: 8 MiB blocks. Double-buffered footprint is
    # 4 x 8 MiB = 32 MiB, i.e. half of v7x's 64 MiB physical VMEM per TC.
    return 8 << 20


def _smooth_grad_relu_pallas(x, block_bytes):
    total = x.size
    dtype = x.dtype
    itemsize = jnp.dtype(dtype).itemsize

    lanes = _pick_lanes(total)
    if lanes is None:
        # TODO(synk): sizes not divisible by 128 would need a padded copy or a
        # masked tail store; fused XLA elementwise is already at roofline.
        return jnp.maximum(x, 0).astype(dtype)

    rows = total // lanes
    x2d = x.reshape(rows, lanes)          # metadata-only reshape, no HBM copy

    sub = _sublane_multiple(dtype)
    # Rows per block from the byte budget, floored to the sublane packing.
    target_rows = max(sub, (block_bytes // (lanes * itemsize)) // sub * sub)

    if rows >= _MIN_GRID_STEPS * sub:
        # Cap tile_rows so the grid has at least _MIN_GRID_STEPS steps: keeps
        # DMA-in / compute / DMA-out overlapped and lets v7x shard the
        # "parallel" axis across both TensorCores.
        cap = max(sub, (rows // _MIN_GRID_STEPS) // sub * sub)
        tile_rows = min(target_rows, cap)
    else:
        # Tiny slab: single (or few) blocks; full-dim tiles are always legal.
        tile_rows = min(target_rows, rows)

    grid = (pl.cdiv(rows, tile_rows),)    # ragged last block handled by Pallas

    tile_bytes = tile_rows * lanes * itemsize
    # 2 input + 2 output double-buffers plus a little headroom; clamp so we
    # never ask for more than v7x's 64 MiB physical VMEM can honor.
    vmem_limit = min(48 << 20, max(16 << 20, 4 * tile_bytes + (4 << 20)))

    cost = pl.CostEstimate(
        flops=total,                       # one max per element
        transcendentals=0,
        bytes_accessed=2 * total * itemsize,
    )

    out2d = pl.pallas_call(
        _smooth_grad_relu_kernel,
        out_shape=jax.ShapeDtypeStruct((rows, lanes), dtype),
        grid_spec=pltpu.PrefetchScalarGridSpec(
            num_scalar_prefetch=0,
            grid=grid,
            in_specs=[pl.BlockSpec((tile_rows, lanes), lambda i: (i, 0))],
            out_specs=pl.BlockSpec((tile_rows, lanes), lambda i: (i, 0)),
        ),
        compiler_params=pltpu.CompilerParams(
            dimension_semantics=("parallel",),   # megacore-shardable on v7x
            vmem_limit_bytes=vmem_limit,
        ),
        cost_estimate=cost,
        # input_output_aliases={0: 0} would halve peak HBM allocation, but is
        # only safe when the caller donates x (backward here only needs x for
        # the surrogate grad, which a fused custom-VJP kernel would recompute).
    )(x2d)

    return out2d.reshape(x.shape)


def smooth_grad_relu(x, *, force_pallas=False, block_bytes=None):
    """Forward of SmoothGradReLUnn: elementwise clamp(min=0)."""
    if x.size == 0:
        return x
    if (not force_pallas
            and x.size * jnp.dtype(x.dtype).itemsize < _FAST_PATH_BYTES):
        # Small/mid tensors: pallas_call fixed cost + 1-step (unpipelined) grid
        # loses to XLA's fused elementwise, which is already at HBM roofline.
        return jnp.maximum(x, 0).astype(x.dtype)
    if block_bytes is None:
        block_bytes = _default_block_bytes()
    return _smooth_grad_relu_pallas(x, block_bytes)


if __name__ == "__main__":
    k1, k2, k3 = jax.random.split(jax.random.PRNGKey(0), 3)

    # 1) Small NCHW input (typical conv-style usage of the module); force the
    #    Pallas path so the kernel itself is exercised.
    x = jax.random.normal(k1, (2, 4, 16, 16), dtype=jnp.float32)
    out = jax.block_until_ready(smooth_grad_relu(x, force_pallas=True))
    ref = jnp.maximum(x, 0.0)
    assert out.shape == x.shape and out.dtype == x.dtype
    assert jnp.array_equal(out, ref), "mismatch vs reference relu (small f32)"

    # 2) Ragged multi-step grid: rows=129, tile_rows=16 -> cdiv grid with a
    #    partial last block (exercises the no-padding ragged path + min-steps).
    x2 = jax.random.normal(k2, (2, 3, 86, 256), dtype=jnp.float32)
    out2 = jax.block_until_ready(
        smooth_grad_relu(x2, force_pallas=True, block_bytes=64 * 1024))
    assert jnp.array_equal(out2, jnp.maximum(x2, 0.0)), "mismatch (ragged grid)"

    # 3) bf16 path (dtype-aware sublane handling, dtype preserved), using the
    #    per-generation default block size.
    x3 = jax.random.normal(k3, (4, 8, 32, 32), dtype=jnp.bfloat16)
    out3 = jax.block_until_ready(smooth_grad_relu(x3, force_pallas=True))
    assert out3.dtype == jnp.bfloat16
    assert jnp.array_equal(out3, jnp.maximum(x3, jnp.bfloat16(0))), "mismatch (bf16)"

    print("KERNEL_OK")
</pallas_src>

<mosaic_0001>
module attributes {stable_mosaic.version = 11 : i64} {
  func.func @_smooth_grad_relu_kernel(%arg0: i32, %arg1: memref<1x2048xf32, #tpu.memory_space<vmem>>, %arg2: memref<1x2048xf32, #tpu.memory_space<vmem>>) attributes {dimension_semantics = [#tpu.dimension_semantics<parallel>], iteration_bounds = array<i64: 1>, scalar_prefetch = 0 : i64, scratch_operands = 0 : i64, tpu.core_type = #tpu.core_type<tc>, window_params = [{transform_indices = @transform_0, window_bounds = array<i64: 1, 2048>}, {transform_indices = @transform_1, window_bounds = array<i64: 1, 2048>}]} {
    %c0 = arith.constant 0 : index
    %c0_0 = arith.constant 0 : index
    %0 = vector.load %arg1[%c0, %c0_0] : memref<1x2048xf32, #tpu.memory_space<vmem>>, vector<1x2048xf32>
    %cst = arith.constant 0.000000e+00 : f32
    %1 = vector.broadcast %cst : f32 to vector<1x2048xf32>
    %2 = arith.maximumf %0, %1 : vector<1x2048xf32>
    %c0_1 = arith.constant 0 : index
    %c0_2 = arith.constant 0 : index
    %3 = vector.load %arg2[%c0_1, %c0_2] : memref<1x2048xf32, #tpu.memory_space<vmem>>, vector<1x2048xf32>
    tpu.vector_store %arg2[%c0_1, %c0_2], %2 {strides = array<i32>} : memref<1x2048xf32, #tpu.memory_space<vmem>>, vector<1x2048xf32>,
    return
  }
  func.func @transform_0(%arg0: i32) -> (i32, i32) {
    %c0_i32 = arith.constant 0 : i32
    %c0_i32_0 = arith.constant 0 : i32
    return %arg0, %c0_i32 : i32, i32
  }
  func.func @transform_1(%arg0: i32) -> (i32, i32) {
    %c0_i32 = arith.constant 0 : i32
    %c0_i32_0 = arith.constant 0 : i32
    return %arg0, %c0_i32 : i32, i32
  }
}

</mosaic_0001>

<llo_original>
// kernel: tpu_custom_call.1
$region0: #{tpu_custom_call.1}
  #allocation0 [shape = 'u32[]', space=smem, size = 0x4, offset = 0x4, fixed_abs, tag = 'smem constant byte address 0x4 - core index']
  #allocation1 [shape = 'u32[144,128]{1,0:T(1,128)}', space=vmem, size = 0x12000, scoped, tag = 'internal scratch']
  %s0 = inlined_call_operand.hbm [shape: f32[1,2048], index: 0, kind: input, shape index: {}]
  %s1 = inlined_call_operand.hbm [shape: f32[1,2048], index: 1, kind: output, shape index: {}]
  %s2 = sld [smem:[#allocation0]]
  $region18: #{tpu_custom_call.1} parent=0
    _
  %s4 = ssub.s32 1, %s2
  %s5 = scalar_select 0, %s4, %s2
  $region1: #{tpu_custom_call.1} parent=0
    #allocation2 [shape = 'u8[8192]{0}', space=vmem, size = 0x2000, scoped, tag = 'input window, operand 0, single buffered']
    #allocation3 [shape = 's32[1]{0}', space=sflag, size = 0x4, scoped, tag = 'scoped memory for tpu_custom_call.1']
    #allocation4 [shape = 's32[1]{0}', space=sflag, size = 0x4, scoped, tag = 'scoped memory for tpu_custom_call.1']
    #allocation5 [shape = 'u8[8192]{0}', space=vmem, size = 0x2000, scoped, tag = 'output window, operand 0, single buffered']
    %6 = vsyncpa [#allocation3], 0
    %7 = vsyncpa [#allocation4], 0
    // Predicated region
    $region2: #{tpu_custom_call.1} parent=1 // pred_check
      _
    $region3: #{tpu_custom_call.1} parent=1 // pred_check_branch
      %9 = sbr.rel (0) target = $region5
    $region4: #{tpu_custom_call.1} parent=1 // pred_region
      %s11 = ssub.s32 256, 256
      %12 = vsyncadd [#allocation3], %s11
      %s14 = sshll.u32 [#allocation2], 4
      %s15 = int_to_ptr.vmem [resolvable:$true] %s14
      %17 = dma.hbm_to_vmem [thread:$0]  %s0, 256, %s15, [#allocation3]
    $region5: #{tpu_custom_call.1} parent=1 // pred_fallthru
      _
    // Predicated region
    $region6: #{tpu_custom_call.1} parent=1 // pred_check
      _
    $region7: #{tpu_custom_call.1} parent=1 // pred_check_branch
      %19 = sbr.rel (0) target = $region9
    $region8: #{tpu_custom_call.1} parent=1 // pred_region
      %20 = dma.done [#allocation3], 256
    $region9: #{tpu_custom_call.1} parent=1 // pred_fallthru
      _
    %v21 = vld [vmem:[#allocation2] sm:$0xff]
    %v22 = vld [vmem:[#allocation2 + $0x8] sm:$0xff]
    %v23 = vmax.f32 %v21, 0.0
    %v24 = vmax.f32 %v22, 0.0
    %25 = vst [vmem:[#allocation5] sm:$0xff] %v23
    %26 = vst [vmem:[#allocation5 + $0x8] sm:$0xff] %v24
    // Predicated region
    $region10: #{tpu_custom_call.1} parent=1 // pred_check
      _
    $region11: #{tpu_custom_call.1} parent=1 // pred_check_branch
      %28 = sbr.rel (0) target = $region13
    $region12: #{tpu_custom_call.1} parent=1 // pred_region
      %s30 = ssub.s32 256, 256
      %31 = vsyncadd [#allocation4], %s30
      %s33 = sshll.u32 [#allocation5], 4
      %s34 = int_to_ptr.vmem [resolvable:$true] %s33
      %36 = dma.vmem_to_hbm [thread:$0]  %s34, 256, %s1, [#allocation4]
    $region13: #{tpu_custom_call.1} parent=1 // pred_fallthru
      _
    // Predicated region
    $region14: #{tpu_custom_call.1} parent=1 // pred_check
      _
    $region15: #{tpu_custom_call.1} parent=1 // pred_check_branch
      %38 = sbr.rel (0) target = $region17
    $region16: #{tpu_custom_call.1} parent=1 // pred_region
      %39 = dma.done [#allocation4], 256
    $region17: #{tpu_custom_call.1} parent=1 // pred_fallthru
      _
    %40 = vsyncpa [#allocation3], 1
    %41 = vsyncpa [#allocation4], 1

</llo_original>
